<compile_context>
chip_gen: v7x
topology: tpu7x:2x2x1
jax: 0.10.0
libtpu: 0.0.40
codegen_flags: <defaults>
</compile_context>

<pallas_src>
import functools

import jax
import jax.numpy as jnp
from jax.experimental import pallas as pl
from jax.experimental.pallas import tpu as pltpu


def _round_up(x, m):
    return (x + m - 1) // m * m


def _fused_mlp_kernel(*refs, num_layers, matmul_dtype):
    """One batch tile: chain of (matmul + bias + relu), then masked softmax.

    refs = (x, class_mask, W_0..W_{L-1}, b_0..b_{L-1}, out)
    """
    x_ref = refs[0]
    mask_ref = refs[1]
    w_refs = refs[2:2 + num_layers]
    b_refs = refs[2 + num_layers:2 + 2 * num_layers]
    o_ref = refs[2 + 2 * num_layers]

    h = x_ref[...]                                           # (TN, D0), operand dtype
    for li in range(num_layers):
        lhs = h.astype(matmul_dtype)                         # no-op on the f32 path
        z = jnp.dot(lhs, w_refs[li][...],
                    preferred_element_type=jnp.float32) + b_refs[li][...]
        h = jnp.maximum(z, jnp.float32(0.0))                 # self.f == torch.relu (last layer too)

    # Masked softmax over the valid class columns: resident additive mask is 0 for
    # real classes and -inf for lane padding (replaces iota + compare + select).
    h = h + mask_ref[...]
    m = jnp.max(h, axis=-1, keepdims=True)
    e = jnp.exp(h - m)
    s = jnp.sum(e, axis=-1, keepdims=True)
    inv = pl.reciprocal(s, approx=True)                      # EUP slot, ~free
    inv = inv * (jnp.float32(2.0) - s * inv)                 # one Newton step -> ~f32 accuracy
    o_ref[...] = (e * inv).astype(o_ref.dtype)


def prepare_ptdeep_params(weights, biases, *, use_bf16=False):
    """Pad hidden/class dims to lane multiples ONCE (hoisted out of the forward hot path)."""
    num_layers = len(weights)
    dims = [int(weights[0].shape[0])] + [int(w.shape[1]) for w in weights]
    for li in range(num_layers):
        assert weights[li].shape == (dims[li], dims[li + 1])
        assert biases[li].shape == (1, dims[li + 1])

    operand_dtype = jnp.bfloat16 if use_bf16 else jnp.float32
    # Input feature dim stays UN-padded (block dim == full array dim is legal; padding
    # D0 would only inflate the x HBM read).  Hidden/class dims are lane-padded to 128.
    # (On v6e/v7x with hidden dims >= 128, a 256 multiple would fill the 2x256^2 MXU
    # better; at these tiny widths the kernel is overhead-bound so 128 is kept.)
    dims_pad = [dims[0]] + [_round_up(d, 128) for d in dims[1:]]

    w_p, b_p = [], []
    for li in range(num_layers):
        wi = jnp.zeros((dims_pad[li], dims_pad[li + 1]), operand_dtype)
        wi = wi.at[:dims[li], :dims[li + 1]].set(weights[li].astype(operand_dtype))
        bi = jnp.zeros((1, dims_pad[li + 1]), jnp.float32)
        bi = bi.at[:, :dims[li + 1]].set(biases[li].astype(jnp.float32))
        w_p.append(wi)
        b_p.append(bi)

    class_mask = jnp.where(jnp.arange(dims_pad[-1]) < dims[-1],
                           jnp.float32(0.0), -jnp.inf).reshape(1, -1).astype(jnp.float32)
    return dict(weights=tuple(w_p), biases=tuple(b_p), class_mask=class_mask,
                dims=tuple(dims), dims_pad=tuple(dims_pad), operand_dtype=operand_dtype)


def ptdeep_forward(x, params, *, tile_n=1024, min_grid_tiles=8):
    """Pallas implementation of PTDeep.forward (activation = relu)."""
    w_p, b_p = params["weights"], params["biases"]
    class_mask = params["class_mask"]
    dims, dims_pad = params["dims"], params["dims_pad"]
    operand_dtype = params["operand_dtype"]
    num_layers = len(w_p)

    n, d0 = x.shape
    assert d0 == dims[0]

    # --- batch tile: as large as requested (amortizes the ~0.35us/step overhead and the
    # MXU weight pushes) but shrunk so the grid keeps >= min_grid_tiles steps, giving
    # the pipeline work to overlap and feeding both v7x TensorCores.
    tile_cap = max(8, _round_up(int(tile_n), 8))
    tile = max(8, min(tile_cap, _round_up(pl.cdiv(n, min_grid_tiles), 8)))
    n_pad = _round_up(n, tile)
    grid = (n_pad // tile,)

    x_p = x.astype(operand_dtype)
    if n_pad != n:                                           # only batch rows ever get padded
        x_p = jnp.pad(x_p, ((0, n_pad - n), (0, 0)))

    # --- VMEM budgeting (generation-aware ceiling, never clamped below requirement) ---
    opw = jnp.dtype(operand_dtype).itemsize
    f32 = 4
    x_blk = tile * dims_pad[0] * opw
    o_blk = tile * dims_pad[-1] * f32
    resident_bytes = (sum(opw * dims_pad[li] * dims_pad[li + 1] for li in range(num_layers))
                      + sum(f32 * dims_pad[li + 1] for li in range(num_layers))
                      + f32 * dims_pad[-1])                  # W_i + b_i + class mask
    try:
        vmem_cap = int(pltpu.get_tpu_info().vmem_capacity_bytes)
    except Exception:
        vmem_cap = 64 << 20                                  # conservative: v7x per-TC capacity
    ceiling = (vmem_cap * 7) // 8                            # headroom for compiler scratch

    flops = 2 * n_pad * sum(dims_pad[li] * dims_pad[li + 1] for li in range(num_layers))
    transcendentals = n_pad * dims_pad[-1]
    bytes_accessed = (x_p.size * opw + sum(w.size for w in w_p) * opw
                      + sum(b.size for b in b_p) * f32 + class_mask.size * f32
                      + n_pad * dims_pad[-1] * f32)

    out_specs = pl.BlockSpec((tile, dims_pad[-1]), lambda i: (i, 0))
    kernel = functools.partial(_fused_mlp_kernel, num_layers=num_layers,
                               matmul_dtype=operand_dtype)

    def run(single_buffer_resident):
        def resident_spec(shape):
            if single_buffer_resident:
                # Read-only + constant index_map -> one VMEM buffer is enough.
                return pl.BlockSpec(shape, lambda i: (0, 0), pipeline_mode=pl.Buffered(1))
            return pl.BlockSpec(shape, lambda i: (0, 0))

        in_specs = [pl.BlockSpec((tile, dims_pad[0]), lambda i: (i, 0)),
                    resident_spec((1, dims_pad[-1]))]
        in_specs += [resident_spec((dims_pad[li], dims_pad[li + 1])) for li in range(num_layers)]
        in_specs += [resident_spec((1, dims_pad[li + 1])) for li in range(num_layers)]

        res_factor = 1 if single_buffer_resident else 2
        needed = 2 * (x_blk + o_blk) + res_factor * resident_bytes
        vmem_limit = min(max(needed + (4 << 20), 32 << 20), ceiling)
        vmem_limit = max(vmem_limit, needed)                 # never under-provision

        return pl.pallas_call(
            kernel,
            out_shape=jax.ShapeDtypeStruct((n_pad, dims_pad[-1]), jnp.float32),
            grid_spec=pltpu.PrefetchScalarGridSpec(
                num_scalar_prefetch=0,
                grid=grid,
                in_specs=in_specs,
                out_specs=out_specs,
            ),
            compiler_params=pltpu.CompilerParams(
                dimension_semantics=("parallel",),           # independent batch tiles -> megacore
                vmem_limit_bytes=int(vmem_limit),
            ),
            cost_estimate=pl.CostEstimate(
                flops=int(flops),
                transcendentals=int(transcendentals),
                bytes_accessed=int(bytes_accessed),
            ),
        )(x_p, class_mask, *w_p, *b_p)

    try:
        out = run(single_buffer_resident=True)
    except Exception:
        # Fallback for jax versions that reject pl.Buffered(1) on top-level BlockSpecs.
        out = run(single_buffer_resident=False)

    return out[:n, :dims[-1]]


def init_ptdeep_params(key, layers):
    """Deterministic init matching nn.Parameter(torch.randn(...)) shapes."""
    weights, biases = [], []
    for idx in range(len(layers) - 1):
        key, kw, kb = jax.random.split(key, 3)
        weights.append(jax.random.normal(kw, (layers[idx], layers[idx + 1]), jnp.float32))
        biases.append(jax.random.normal(kb, (1, layers[idx + 1]), jnp.float32))
    return weights, biases


def _reference_forward(x, weights, biases):
    """Plain-JAX reference mirroring PTDeep.forward exactly (relu on every layer, then softmax)."""
    h = x.astype(jnp.float32)
    for w, b in zip(weights, biases):
        h = jnp.maximum(h @ w + b, 0.0)
    return jax.nn.softmax(h, axis=1)


if __name__ == "__main__":
    key = jax.random.PRNGKey(0)

    # Config 1: D=32, hidden=64, C=10, batch N=64 (grid of 8 batch tiles).
    # Config 2: deeper net, N=40 (grid of 5 tiles -> never collapses to a single step).
    configs = [
        ([32, 64, 10], 64),
        ([32, 64, 64, 8], 40),
    ]

    ok = True
    for layers, n in configs:
        key, kx, kp = jax.random.split(key, 3)
        x = jax.random.normal(kx, (n, layers[0]), jnp.float32)
        weights, biases = init_ptdeep_params(kp, layers)
        params = prepare_ptdeep_params(weights, biases)       # padding hoisted out of forward
        probs = jax.block_until_ready(ptdeep_forward(x, params))

        ref = _reference_forward(x, weights, biases)
        assert probs.shape == (n, layers[-1])
        assert jnp.allclose(jnp.sum(probs, axis=1), 1.0, atol=1e-5)
        ok &= bool(jnp.allclose(probs, ref, atol=1e-5, rtol=1e-5))

    # Optional bf16-MXU-operand path (the v6e/v7x compute lever); loose tolerance check.
    layers, n = [32, 64, 10], 64
    key, kx, kp = jax.random.split(key, 3)
    x = jax.random.normal(kx, (n, layers[0]), jnp.float32)
    weights, biases = init_ptdeep_params(kp, layers)
    params_bf16 = prepare_ptdeep_params(weights, biases, use_bf16=True)
    probs_bf16 = jax.block_until_ready(ptdeep_forward(x, params_bf16))
    ref = _reference_forward(x, weights, biases)
    assert probs_bf16.shape == (n, layers[-1])
    assert jnp.allclose(jnp.sum(probs_bf16, axis=1), 1.0, atol=1e-2)
    ok &= bool(jnp.max(jnp.abs(probs_bf16 - ref)) < 0.25)

    assert ok
    print("KERNEL_OK")
</pallas_src>

<mosaic_0001>
module attributes {stable_mosaic.version = 11 : i64} {
  func.func @_fused_mlp_kernel(%arg0: i32, %arg1: memref<8x32xf32, #tpu.memory_space<vmem>>, %arg2: memref<1x128xf32, #tpu.memory_space<vmem>>, %arg3: memref<32x128xf32, #tpu.memory_space<vmem>>, %arg4: memref<128x128xf32, #tpu.memory_space<vmem>>, %arg5: memref<1x128xf32, #tpu.memory_space<vmem>>, %arg6: memref<1x128xf32, #tpu.memory_space<vmem>>, %arg7: memref<8x128xf32, #tpu.memory_space<vmem>>) attributes {dimension_semantics = [#tpu.dimension_semantics<parallel>], iteration_bounds = array<i64: 8>, scalar_prefetch = 0 : i64, scratch_operands = 0 : i64, tpu.core_type = #tpu.core_type<tc>, window_params = [{transform_indices = @transform_0, window_bounds = array<i64: 8, 32>}, {pipeline_mode = #tpu.pipeline_mode<synchronous>, transform_indices = @transform_1, window_bounds = array<i64: 1, 128>}, {pipeline_mode = #tpu.pipeline_mode<synchronous>, transform_indices = @transform_2, window_bounds = array<i64: 32, 128>}, {pipeline_mode = #tpu.pipeline_mode<synchronous>, transform_indices = @transform_3, window_bounds = array<i64: 128, 128>}, {pipeline_mode = #tpu.pipeline_mode<synchronous>, transform_indices = @transform_4, window_bounds = array<i64: 1, 128>}, {pipeline_mode = #tpu.pipeline_mode<synchronous>, transform_indices = @transform_5, window_bounds = array<i64: 1, 128>}, {transform_indices = @transform_6, window_bounds = array<i64: 8, 128>}]} {
    %c0 = arith.constant 0 : index
    %c0_0 = arith.constant 0 : index
    %0 = vector.load %arg1[%c0, %c0_0] : memref<8x32xf32, #tpu.memory_space<vmem>>, vector<8x32xf32>
    %c0_1 = arith.constant 0 : index
    %c0_2 = arith.constant 0 : index
    %1 = vector.load %arg3[%c0_1, %c0_2] : memref<32x128xf32, #tpu.memory_space<vmem>>, vector<32x128xf32>
    %cst = arith.constant dense<0.000000e+00> : vector<8x128xf32>
    %2 = tpu.matmul %0, %1, %cst {dimension_numbers = #tpu.dot_dimension_numbers<[1], [0], [0], [1], [0, 0, 1, 1], [], []>} : vector<8x32xf32>, vector<32x128xf32>, vector<8x128xf32> -> vector<8x128xf32>
    %c0_3 = arith.constant 0 : index
    %c0_4 = arith.constant 0 : index
    %3 = vector.load %arg5[%c0_3, %c0_4] : memref<1x128xf32, #tpu.memory_space<vmem>>, vector<1x128xf32>
    %4 = vector.broadcast %3 : vector<1x128xf32> to vector<8x128xf32>
    %5 = arith.addf %2, %4 : vector<8x128xf32>
    %cst_5 = arith.constant 0.000000e+00 : f32
    %6 = vector.broadcast %cst_5 : f32 to vector<8x128xf32>
    %7 = arith.maximumf %5, %6 : vector<8x128xf32>
    %c0_6 = arith.constant 0 : index
    %c0_7 = arith.constant 0 : index
    %8 = vector.load %arg4[%c0_6, %c0_7] : memref<128x128xf32, #tpu.memory_space<vmem>>, vector<128x128xf32>
    %cst_8 = arith.constant dense<0.000000e+00> : vector<8x128xf32>
    %9 = tpu.matmul %7, %8, %cst_8 {dimension_numbers = #tpu.dot_dimension_numbers<[1], [0], [0], [1], [0, 0, 1, 1], [], []>} : vector<8x128xf32>, vector<128x128xf32>, vector<8x128xf32> -> vector<8x128xf32>
    %c0_9 = arith.constant 0 : index
    %c0_10 = arith.constant 0 : index
    %10 = vector.load %arg6[%c0_9, %c0_10] : memref<1x128xf32, #tpu.memory_space<vmem>>, vector<1x128xf32>
    %11 = vector.broadcast %10 : vector<1x128xf32> to vector<8x128xf32>
    %12 = arith.addf %9, %11 : vector<8x128xf32>
    %cst_11 = arith.constant 0.000000e+00 : f32
    %13 = vector.broadcast %cst_11 : f32 to vector<8x128xf32>
    %14 = arith.maximumf %12, %13 : vector<8x128xf32>
    %c0_12 = arith.constant 0 : index
    %c0_13 = arith.constant 0 : index
    %15 = vector.load %arg2[%c0_12, %c0_13] : memref<1x128xf32, #tpu.memory_space<vmem>>, vector<1x128xf32>
    %16 = vector.broadcast %15 : vector<1x128xf32> to vector<8x128xf32>
    %17 = arith.addf %14, %16 : vector<8x128xf32>
    %cst_14 = arith.constant dense<0xFF800000> : vector<8xf32>
    %18 = vector.multi_reduction <maximumf>, %17, %cst_14 [1] : vector<8x128xf32> to vector<8xf32>
    %19 = vector.shape_cast %18 : vector<8xf32> to vector<8x1xf32>
    %20 = vector.broadcast %19 : vector<8x1xf32> to vector<8x128xf32>
    %21 = arith.subf %17, %20 : vector<8x128xf32>
    %22 = math.exp %21 : vector<8x128xf32>
    %cst_15 = arith.constant dense<0.000000e+00> : vector<8xf32>
    %23 = vector.multi_reduction <add>, %22, %cst_15 [1] : vector<8x128xf32> to vector<8xf32>
    %24 = vector.shape_cast %23 : vector<8xf32> to vector<8x1xf32>
    %25 = tpu.reciprocal %24 {approx = true} : vector<8x1xf32> -> vector<8x1xf32>
    %26 = arith.mulf %24, %25 : vector<8x1xf32>
    %cst_16 = arith.constant 2.000000e+00 : f32
    %27 = vector.broadcast %cst_16 : f32 to vector<8x1xf32>
    %28 = arith.subf %27, %26 : vector<8x1xf32>
    %29 = arith.mulf %25, %28 : vector<8x1xf32>
    %30 = vector.broadcast %29 : vector<8x1xf32> to vector<8x128xf32>
    %31 = arith.mulf %22, %30 : vector<8x128xf32>
    %c0_17 = arith.constant 0 : index
    %c0_18 = arith.constant 0 : index
    %32 = vector.load %arg7[%c0_17, %c0_18] : memref<8x128xf32, #tpu.memory_space<vmem>>, vector<8x128xf32>
    tpu.vector_store %arg7[%c0_17, %c0_18], %31 {strides = array<i32>} : memref<8x128xf32, #tpu.memory_space<vmem>>, vector<8x128xf32>,
    return
  }
  func.func @transform_0(%arg0: i32) -> (i32, i32) {
    %c0_i32 = arith.constant 0 : i32
    %c0_i32_0 = arith.constant 0 : i32
    return %arg0, %c0_i32 : i32, i32
  }
  func.func @transform_1(%arg0: i32) -> (i32, i32) {
    %c0_i32 = arith.constant 0 : i32
    %c0_i32_0 = arith.constant 0 : i32
    %c0_i32_1 = arith.constant 0 : i32
    return %c0_i32, %c0_i32_0 : i32, i32
  }
  func.func @transform_2(%arg0: i32) -> (i32, i32) {
    %c0_i32 = arith.constant 0 : i32
    %c0_i32_0 = arith.constant 0 : i32
    %c0_i32_1 = arith.constant 0 : i32
    return %c0_i32, %c0_i32_0 : i32, i32
  }
  func.func @transform_3(%arg0: i32) -> (i32, i32) {
    %c0_i32 = arith.constant 0 : i32
    %c0_i32_0 = arith.constant 0 : i32
    %c0_i32_1 = arith.constant 0 : i32
    return %c0_i32, %c0_i32_0 : i32, i32
  }
  func.func @transform_4(%arg0: i32) -> (i32, i32) {
    %c0_i32 = arith.constant 0 : i32
    %c0_i32_0 = arith.constant 0 : i32
    %c0_i32_1 = arith.constant 0 : i32
    return %c0_i32, %c0_i32_0 : i32, i32
  }
  func.func @transform_5(%arg0: i32) -> (i32, i32) {
    %c0_i32 = arith.constant 0 : i32
    %c0_i32_0 = arith.constant 0 : i32
    %c0_i32_1 = arith.constant 0 : i32
    return %c0_i32, %c0_i32_0 : i32, i32
  }
  func.func @transform_6(%arg0: i32) -> (i32, i32) {
    %c0_i32 = arith.constant 0 : i32
    %c0_i32_0 = arith.constant 0 : i32
    return %arg0, %c0_i32 : i32, i32
  }
}

module attributes {stable_mosaic.version = 11 : i64} {
  func.func @_fused_mlp_kernel(%arg0: i32, %arg1: memref<8x32xf32, #tpu.memory_space<vmem>>, %arg2: memref<1x128xf32, #tpu.memory_space<vmem>>, %arg3: memref<32x128xf32, #tpu.memory_space<vmem>>, %arg4: memref<128x128xf32, #tpu.memory_space<vmem>>, %arg5: memref<1x128xf32, #tpu.memory_space<vmem>>, %arg6: memref<1x128xf32, #tpu.memory_space<vmem>>, %arg7: memref<8x128xf32, #tpu.memory_space<vmem>>) attributes {dimension_semantics = [#tpu.dimension_semantics<parallel>], iteration_bounds = array<i64: 8>, scalar_prefetch = 0 : i64, scratch_operands = 0 : i64, tpu.core_type = #tpu.core_type<tc>, window_params = [{transform_indices = @transform_0, window_bounds = array<i64: 8, 32>}, {pipeline_mode = #tpu.pipeline_mode<synchronous>, transform_indices = @transform_1, window_bounds = array<i64: 1, 128>}, {pipeline_mode = #tpu.pipeline_mode<synchronous>, transform_indices = @transform_2, window_bounds = array<i64: 32, 128>}, {pipeline_mode = #tpu.pipeline_mode<synchronous>, transform_indices = @transform_3, window_bounds = array<i64: 128, 128>}, {pipeline_mode = #tpu.pipeline_mode<synchronous>, transform_indices = @transform_4, window_bounds = array<i64: 1, 128>}, {pipeline_mode = #tpu.pipeline_mode<synchronous>, transform_indices = @transform_5, window_bounds = array<i64: 1, 128>}, {transform_indices = @transform_6, window_bounds = array<i64: 8, 128>}]} {
    %c0 = arith.constant 0 : index
    %c0_0 = arith.constant 0 : index
    %0 = vector.load %arg1[%c0, %c0_0] : memref<8x32xf32, #tpu.memory_space<vmem>>, vector<8x32xf32>
    %c0_1 = arith.constant 0 : index
    %c0_2 = arith.constant 0 : index
    %1 = vector.load %arg3[%c0_1, %c0_2] : memref<32x128xf32, #tpu.memory_space<vmem>>, vector<32x128xf32>
    %cst = arith.constant dense<0.000000e+00> : vector<8x128xf32>
    %2 = tpu.matmul %0, %1, %cst {dimension_numbers = #tpu.dot_dimension_numbers<[1], [0], [0], [1], [0, 0, 1, 1], [], []>} : vector<8x32xf32>, vector<32x128xf32>, vector<8x128xf32> -> vector<8x128xf32>
    %c0_3 = arith.constant 0 : index
    %c0_4 = arith.constant 0 : index
    %3 = vector.load %arg5[%c0_3, %c0_4] : memref<1x128xf32, #tpu.memory_space<vmem>>, vector<1x128xf32>
    %4 = vector.broadcast %3 : vector<1x128xf32> to vector<8x128xf32>
    %5 = arith.addf %2, %4 : vector<8x128xf32>
    %cst_5 = arith.constant 0.000000e+00 : f32
    %6 = vector.broadcast %cst_5 : f32 to vector<8x128xf32>
    %7 = arith.maximumf %5, %6 : vector<8x128xf32>
    %c0_6 = arith.constant 0 : index
    %c0_7 = arith.constant 0 : index
    %8 = vector.load %arg4[%c0_6, %c0_7] : memref<128x128xf32, #tpu.memory_space<vmem>>, vector<128x128xf32>
    %cst_8 = arith.constant dense<0.000000e+00> : vector<8x128xf32>
    %9 = tpu.matmul %7, %8, %cst_8 {dimension_numbers = #tpu.dot_dimension_numbers<[1], [0], [0], [1], [0, 0, 1, 1], [], []>} : vector<8x128xf32>, vector<128x128xf32>, vector<8x128xf32> -> vector<8x128xf32>
    %c0_9 = arith.constant 0 : index
    %c0_10 = arith.constant 0 : index
    %10 = vector.load %arg6[%c0_9, %c0_10] : memref<1x128xf32, #tpu.memory_space<vmem>>, vector<1x128xf32>
    %11 = vector.broadcast %10 : vector<1x128xf32> to vector<8x128xf32>
    %12 = arith.addf %9, %11 : vector<8x128xf32>
    %cst_11 = arith.constant 0.000000e+00 : f32
    %13 = vector.broadcast %cst_11 : f32 to vector<8x128xf32>
    %14 = arith.maximumf %12, %13 : vector<8x128xf32>
    %c0_12 = arith.constant 0 : index
    %c0_13 = arith.constant 0 : index
    %15 = vector.load %arg2[%c0_12, %c0_13] : memref<1x128xf32, #tpu.memory_space<vmem>>, vector<1x128xf32>
    %16 = vector.broadcast %15 : vector<1x128xf32> to vector<8x128xf32>
    %17 = arith.addf %14, %16 : vector<8x128xf32>
    %cst_14 = arith.constant dense<0xFF800000> : vector<8xf32>
    %18 = vector.multi_reduction <maximumf>, %17, %cst_14 [1] : vector<8x128xf32> to vector<8xf32>
    %19 = vector.shape_cast %18 : vector<8xf32> to vector<8x1xf32>
    %20 = vector.broadcast %19 : vector<8x1xf32> to vector<8x128xf32>
    %21 = arith.subf %17, %20 : vector<8x128xf32>
    %22 = math.exp %21 : vector<8x128xf32>
    %cst_15 = arith.constant dense<0.000000e+00> : vector<8xf32>
    %23 = vector.multi_reduction <add>, %22, %cst_15 [1] : vector<8x128xf32> to vector<8xf32>
    %24 = vector.shape_cast %23 : vector<8xf32> to vector<8x1xf32>
    %25 = tpu.reciprocal %24 {approx = true} : vector<8x1xf32> -> vector<8x1xf32>
    %26 = arith.mulf %24, %25 : vector<8x1xf32>
    %cst_16 = arith.constant 2.000000e+00 : f32
    %27 = vector.broadcast %cst_16 : f32 to vector<8x1xf32>
    %28 = arith.subf %27, %26 : vector<8x1xf32>
    %29 = arith.mulf %25, %28 : vector<8x1xf32>
    %30 = vector.broadcast %29 : vector<8x1xf32> to vector<8x128xf32>
    %31 = arith.mulf %22, %30 : vector<8x128xf32>
    %c0_17 = arith.constant 0 : index
    %c0_18 = arith.constant 0 : index
    %32 = vector.load %arg7[%c0_17, %c0_18] : memref<8x128xf32, #tpu.memory_space<vmem>>, vector<8x128xf32>
    tpu.vector_store %arg7[%c0_17, %c0_18], %31 {strides = array<i32>} : memref<8x128xf32, #tpu.memory_space<vmem>>, vector<8x128xf32>,
    return
  }
  func.func @transform_0(%arg0: i32) -> (i32, i32) {
    %c0_i32 = arith.constant 0 : i32
    %c0_i32_0 = arith.constant 0 : i32
    return %arg0, %c0_i32 : i32, i32
  }
  func.func @transform_1(%arg0: i32) -> (i32, i32) {
    %c0_i32 = arith.constant 0 : i32
    %c0_i32_0 = arith.constant 0 : i32
    %c0_i32_1 = arith.constant 0 : i32
    return %c0_i32, %c0_i32_0 : i32, i32
  }
  func.func @transform_2(%arg0: i32) -> (i32, i32) {
    %c0_i32 = arith.constant 0 : i32
    %c0_i32_0 = arith.constant 0 : i32
    %c0_i32_1 = arith.constant 0 : i32
    return %c0_i32, %c0_i32_0 : i32, i32
  }
  func.func @transform_3(%arg0: i32) -> (i32, i32) {
    %c0_i32 = arith.constant 0 : i32
    %c0_i32_0 = arith.constant 0 : i32
    %c0_i32_1 = arith.constant 0 : i32
    return %c0_i32, %c0_i32_0 : i32, i32
  }
  func.func @transform_4(%arg0: i32) -> (i32, i32) {
    %c0_i32 = arith.constant 0 : i32
    %c0_i32_0 = arith.constant 0 : i32
    %c0_i32_1 = arith.constant 0 : i32
    return %c0_i32, %c0_i32_0 : i32, i32
  }
  func.func @transform_5(%arg0: i32) -> (i32, i32) {
    %c0_i32 = arith.constant 0 : i32
    %c0_i32_0 = arith.constant 0 : i32
    %c0_i32_1 = arith.constant 0 : i32
    return %c0_i32, %c0_i32_0 : i32, i32
  }
  func.func @transform_6(%arg0: i32) -> (i32, i32) {
    %c0_i32 = arith.constant 0 : i32
    %c0_i32_0 = arith.constant 0 : i32
    return %arg0, %c0_i32 : i32, i32
  }
}

</mosaic_0001>

<llo_original>
// kernel: tpu_custom_call.1
$region0: #{tpu_custom_call.1}
  #allocation0 [shape = 'u32[]', space=smem, size = 0x4, offset = 0x4, fixed_abs, tag = 'smem constant byte address 0x4 - core index']
  #allocation1 [shape = 'u32[144,128]{1,0:T(1,128)}', space=vmem, size = 0x12000, scoped, tag = 'internal scratch']
  %s0 = inlined_call_operand.vmem [shape: f32[64,32], index: 0, kind: input, shape index: {}]
  %s1 = inlined_call_operand.vmem [shape: f32[1,128], index: 1, kind: input, shape index: {}]
  %s2 = inlined_call_operand.vmem [shape: f32[32,128], index: 2, kind: input, shape index: {}]
  %s3 = inlined_call_operand.hbm [shape: f32[128,128], index: 3, kind: input, shape index: {}]
  %s4 = inlined_call_operand.vmem [shape: f32[1,128], index: 4, kind: input, shape index: {}]
  %s5 = inlined_call_operand.vmem [shape: f32[1,128], index: 5, kind: input, shape index: {}]
  %s6 = inlined_call_operand.hbm [shape: f32[64,128], index: 6, kind: output, shape index: {}]
  %s7 = sld [smem:[#allocation0]]
  $region61: #{tpu_custom_call.1} parent=0
    _
  %s9 = ssub.s32 1, %s7
  %s10 = scalar_select 0, %s9, %s7
  $region1: #{tpu_custom_call.1} parent=0
    #allocation2 [shape = 'u8[65536]{0}', space=vmem, size = 0x10000, scoped, tag = 'input window, operand 3, single buffered']
    #allocation3 [shape = 's32[2]{0}', space=sflag, size = 0x8, scoped, tag = 'scoped memory for tpu_custom_call.1']
    #allocation4 [shape = 's32[2]{0}', space=sflag, size = 0x8, scoped, tag = 'scoped memory for tpu_custom_call.1']
    #allocation5 [shape = 'u8[8192]{0}', space=vmem, size = 0x2000, scoped, tag = 'output window, operand 0']
    %11 = vsyncpa [#allocation3], 0
    %12 = vsyncpa [#allocation4], 0
    %s13 = scalar_lea.sflag [#allocation4], 1
    %14 = vsyncpa %s13, 0
    loop: start=0, step=1, limit=10
    $region2: #{tpu_custom_call.1} parent=1 // loop_pre_header
      _
    $region3: #{tpu_custom_call.1} parent=1 // loop_header
      %s16 = sphi 0, %s20
      %p17 = scmp.ge.s32.totalorder %s16, 10
      %s26 = sphi 0, %s28
      %s29 = sphi 0, %s26
      %s30 = sphi 0, %s29
      %s46 = sphi 0, %s30
      %s50 = sphi 0, %s50
      %s52 = sphi 0, %s50
      %s53 = sphi 0, %s52
      %s67 = sphi 0, %s53
      %s71 = sphi 0, %s71
      %s73 = sphi 0, %s71
      %s74 = sphi 0, %s73
      %s88 = sphi 0, %s74
      %s92 = sphi 0, %s92
      %s94 = sphi 0, %s92
      %s95 = sphi 0, %s94
      %s109 = sphi 0, %s95
      %s113 = sphi 0, %s113
      %s115 = sphi 0, %s113
      %s116 = sphi 0, %s115
      %s130 = sphi 0, %s116
      %s134 = sphi 0, %s134
      %s136 = sphi 0, %s134
      %s137 = sphi 0, %s136
      %s151 = sphi 0, %s137
      %s157 = sphi 0, %s159
      %s160 = sphi 0, %s157
      %s161 = sphi 0, %s160
      %s177 = sphi 0, %s161
    $region4: #{tpu_custom_call.1} parent=1 // loop_header_branch
      %19 = sbr.rel (%p17) target = $region8
    $region5: #{tpu_custom_call.1} parent=1 // loop_body
      %s21 = ssub.s32 %s16, 1
      %s22 = ssub.s32 %s16, 2
      %s23 = sadd.s32 %s16, 1
      %s24 = ssub.s32 %s16, %s23
      %p25 = scmp.eq.s32.totalorder %s24, 0
      %s27 = sadd.s32 %s26, 1
      %s28 = scalar_select %p25, %s26, %s27
      %p31 = pneg %p25
      %p32 = scmp.eq.s32.totalorder %s16, 7
      %p33 = por %p31, %p32
      %p34 = scmp.ne.s32.totalorder %s26, %s29
      %p35 = scmp.eq.s32.totalorder %s16, 0
      %p36 = por %p34, %p35
      %p37 = scmp.ne.s32.totalorder %s26, %s29
      %p38 = scmp.eq.s32.totalorder %s21, 7
      %p39 = por %p37, %p38
      %p40 = scmp.ne.s32.totalorder %s29, %s30
      %p41 = scmp.eq.s32.totalorder %s21, 0
      %p42 = por %p40, %p41
      %p43 = scmp.ne.s32.totalorder %s29, %s30
      %p44 = scmp.eq.s32.totalorder %s22, 7
      %p45 = por %p43, %p44
      %p47 = scmp.ne.s32.totalorder %s30, %s46
      %p48 = scmp.eq.s32.totalorder %s22, 0
      %p49 = por %p47, %p48
      %s51 = sadd.s32 %s50, 1
      %p54 = scmp.eq.s32.totalorder %s16, 7
      %p55 = scmp.ne.s32.totalorder %s50, %s52
      %p56 = scmp.eq.s32.totalorder %s16, 0
      %p57 = por %p55, %p56
      %p58 = scmp.ne.s32.totalorder %s50, %s52
      %p59 = scmp.eq.s32.totalorder %s21, 7
      %p60 = por %p58, %p59
      %p61 = scmp.ne.s32.totalorder %s52, %s53
      %p62 = scmp.eq.s32.totalorder %s21, 0
      %p63 = por %p61, %p62
      %p64 = scmp.ne.s32.totalorder %s52, %s53
      %p65 = scmp.eq.s32.totalorder %s22, 7
      %p66 = por %p64, %p65
      %p68 = scmp.ne.s32.totalorder %s53, %s67
      %p69 = scmp.eq.s32.totalorder %s22, 0
      %p70 = por %p68, %p69
      %s72 = sadd.s32 %s71, 1
      %p75 = scmp.eq.s32.totalorder %s16, 7
      %p76 = scmp.ne.s32.totalorder %s71, %s73
      %p77 = scmp.eq.s32.totalorder %s16, 0
      %p78 = por %p76, %p77
      %p79 = scmp.ne.s32.totalorder %s71, %s73
      %p80 = scmp.eq.s32.totalorder %s21, 7
      %p81 = por %p79, %p80
      %p82 = scmp.ne.s32.totalorder %s73, %s74
      %p83 = scmp.eq.s32.totalorder %s21, 0
      %p84 = por %p82, %p83
      %p85 = scmp.ne.s32.totalorder %s73, %s74
      %p86 = scmp.eq.s32.totalorder %s22, 7
      %p87 = por %p85, %p86
      %p89 = scmp.ne.s32.totalorder %s74, %s88
      %p90 = scmp.eq.s32.totalorder %s22, 0
      %p91 = por %p89, %p90
      %s93 = sadd.s32 %s92, 1
      %p96 = scmp.eq.s32.totalorder %s16, 7
      %p97 = scmp.ne.s32.totalorder %s92, %s94
      %p98 = scmp.eq.s32.totalorder %s16, 0
      %p99 = por %p97, %p98
      %p100 = scmp.ne.s32.totalorder %s92, %s94
      %p101 = scmp.eq.s32.totalorder %s21, 7
      %p102 = por %p100, %p101
      %p103 = scmp.ne.s32.totalorder %s94, %s95
      %p104 = scmp.eq.s32.totalorder %s21, 0
      %p105 = por %p103, %p104
      %p106 = scmp.ne.s32.totalorder %s94, %s95
      %p107 = scmp.eq.s32.totalorder %s22, 7
      %p108 = por %p106, %p107
      %p110 = scmp.ne.s32.totalorder %s95, %s109
      %p111 = scmp.eq.s32.totalorder %s22, 0
      %p112 = por %p110, %p111
      %s114 = sadd.s32 %s113, 1
      %p117 = scmp.eq.s32.totalorder %s16, 7
      %p118 = scmp.ne.s32.totalorder %s113, %s115
      %p119 = scmp.eq.s32.totalorder %s16, 0
      %p120 = por %p118, %p119
      %p121 = scmp.ne.s32.totalorder %s113, %s115
      %p122 = scmp.eq.s32.totalorder %s21, 7
      %p123 = por %p121, %p122
      %p124 = scmp.ne.s32.totalorder %s115, %s116
      %p125 = scmp.eq.s32.totalorder %s21, 0
      %p126 = por %p124, %p125
      %p127 = scmp.ne.s32.totalorder %s115, %s116
      %p128 = scmp.eq.s32.totalorder %s22, 7
      %p129 = por %p127, %p128
      %p131 = scmp.ne.s32.totalorder %s116, %s130
      %p132 = scmp.eq.s32.totalorder %s22, 0
      %p133 = por %p131, %p132
      %s135 = sadd.s32 %s134, 1
      %p138 = scmp.eq.s32.totalorder %s16, 7
      %p139 = scmp.ne.s32.totalorder %s134, %s136
      %p140 = scmp.eq.s32.totalorder %s16, 0
      %p141 = por %p139, %p140
      %p142 = scmp.ne.s32.totalorder %s134, %s136
      %p143 = scmp.eq.s32.totalorder %s21, 7
      %p144 = por %p142, %p143
      %p145 = scmp.ne.s32.totalorder %s136, %s137
      %p146 = scmp.eq.s32.totalorder %s21, 0
      %p147 = por %p145, %p146
      %p148 = scmp.ne.s32.totalorder %s136, %s137
      %p149 = scmp.eq.s32.totalorder %s22, 7
      %p150 = por %p148, %p149
      %p152 = scmp.ne.s32.totalorder %s137, %s151
      %p153 = scmp.eq.s32.totalorder %s22, 0
      %p154 = por %p152, %p153
      %s155 = ssub.s32 %s16, %s23
      %p156 = scmp.eq.s32.totalorder %s155, 0
      %s158 = sadd.s32 %s157, 1
      %s159 = scalar_select %p156, %s157, %s158
      %p162 = pneg %p156
      %p163 = scmp.eq.s32.totalorder %s16, 7
      %p164 = por %p162, %p163
      %p165 = scmp.ne.s32.totalorder %s157, %s160
      %p166 = scmp.eq.s32.totalorder %s16, 0
      %p167 = por %p165, %p166
      %p168 = scmp.ne.s32.totalorder %s157, %s160
      %p169 = scmp.eq.s32.totalorder %s21, 7
      %p170 = por %p168, %p169
      %p171 = scmp.ne.s32.totalorder %s160, %s161
      %p172 = scmp.eq.s32.totalorder %s21, 0
      %p173 = por %p171, %p172
      %p174 = scmp.ne.s32.totalorder %s160, %s161
      %p175 = scmp.eq.s32.totalorder %s22, 7
      %p176 = por %p174, %p175
      %p178 = scmp.ne.s32.totalorder %s161, %s177
      %p179 = scmp.eq.s32.totalorder %s22, 0
      %p180 = por %p178, %p179
      %p181 = scmp.le.s32.totalorder 1, %s16
      %p182 = scmp.lt.s32.totalorder %s16, 9
      %p183 = pnand %p181, %p182
      %p184 = pneg %p183
      // Predicated region
      $region9: #{tpu_custom_call.1} parent=5 // pred_check
        _
      $region10: #{tpu_custom_call.1} parent=5 // pred_check_branch
        %186 = sbr.rel (%p183) target = $region12
      $region11: #{tpu_custom_call.1} parent=5 // pred_region
        %s187 = ssub.s32 %s16, 1
        // Predicated region
        $region13: #{tpu_custom_call.1} parent=11 // pred_check
          %p188 = pneg %p63
        $region14: #{tpu_custom_call.1} parent=11 // pred_check_branch
          %190 = sbr.rel (%p188) target = $region16
        $region15: #{tpu_custom_call.1} parent=11 // pred_region
          _
        $region16: #{tpu_custom_call.1} parent=11 // pred_fallthru
          _
        // Predicated region
        $region17: #{tpu_custom_call.1} parent=11 // pred_check
          %p191 = pneg %p84
        $region18: #{tpu_custom_call.1} parent=11 // pred_check_branch
          %193 = sbr.rel (%p191) target = $region20
        $region19: #{tpu_custom_call.1} parent=11 // pred_region
          _
        $region20: #{tpu_custom_call.1} parent=11 // pred_fallthru
          _
        // Predicated region
        $region21: #{tpu_custom_call.1} parent=11 // pred_check
          %p194 = pneg %p105
        $region22: #{tpu_custom_call.1} parent=11 // pred_check_branch
          %196 = sbr.rel (%p194) target = $region24
        $region23: #{tpu_custom_call.1} parent=11 // pred_region
          %s198 = ssub.s32 2048, 2048
          %199 = vsyncadd [#allocation3], %s198
          %s200 = sshll.u32 [#allocation2], 4
          %s201 = int_to_ptr.vmem [resolvable:$true] %s200
          %206 = dma.hbm_to_vmem [thread:$0]  %s3, 2048, %s201, [#allocation3], 128, 128, 8
        $region24: #{tpu_custom_call.1} parent=11 // pred_fallthru
          _
        // Predicated region
        $region25: #{tpu_custom_call.1} parent=11 // pred_check
          %p207 = pneg %p126
        $region26: #{tpu_custom_call.1} parent=11 // pred_check_branch
          %209 = sbr.rel (%p207) target = $region28
        $region27: #{tpu_custom_call.1} parent=11 // pred_region
          _
        $region28: #{tpu_custom_call.1} parent=11 // pred_fallthru
          _
        // Predicated region
        $region29: #{tpu_custom_call.1} parent=11 // pred_check
          %p210 = pneg %p147
        $region30: #{tpu_custom_call.1} parent=11 // pred_check_branch
          %212 = sbr.rel (%p210) target = $region32
        $region31: #{tpu_custom_call.1} parent=11 // pred_region
          _
        $region32: #{tpu_custom_call.1} parent=11 // pred_fallthru
          _
      $region12: #{tpu_custom_call.1} parent=5 // pred_fallthru
        _
      %p213 = scmp.lt.s32.totalorder %s16, 8
      // Predicated region
      $region33: #{tpu_custom_call.1} parent=5 // pred_check
        %p214 = pneg %p213
      $region34: #{tpu_custom_call.1} parent=5 // pred_check_branch
        %216 = sbr.rel (%p214) target = $region36
      $region35: #{tpu_custom_call.1} parent=5 // pred_region
        // Predicated region
        $region37: #{tpu_custom_call.1} parent=35 // pred_check
          %p217 = pneg %p36
        $region38: #{tpu_custom_call.1} parent=35 // pred_check_branch
          %219 = sbr.rel (%p217) target = $region40
        $region39: #{tpu_custom_call.1} parent=35 // pred_region
          %p220 = scmp.lt.s32.totalorder %s16, 7
          %s221 = scalar_select %p220, %s16, 7
          %s222 = smul.addr %s221, 8
          %s223 = scalar_lea.vmem %s0, %s222
        $region40: #{tpu_custom_call.1} parent=35 // pred_fallthru
          _
      $region36: #{tpu_custom_call.1} parent=5 // pred_fallthru
        _
      %p224 = scmp.le.s32.totalorder 1, %s16
      %p225 = scmp.lt.s32.totalorder %s16, 9
      %p226 = pnand %p224, %p225
      %p227 = pneg %p226
      // Predicated region
      $region41: #{tpu_custom_call.1} parent=5 // pred_check
        _
      $region42: #{tpu_custom_call.1} parent=5 // pred_check_branch
        %229 = sbr.rel (%p226) target = $region44
      $region43: #{tpu_custom_call.1} parent=5 // pred_region
        %s230 = ssub.s32 %s16, 1
        // Predicated region
        $region45: #{tpu_custom_call.1} parent=43 // pred_check
          %p231 = pneg %p105
        $region46: #{tpu_custom_call.1} parent=43 // pred_check_branch
          %233 = sbr.rel (%p231) target = $region48
        $region47: #{tpu_custom_call.1} parent=43 // pred_region
          %234 = dma.done [#allocation3], 2048
        $region48: #{tpu_custom_call.1} parent=43 // pred_fallthru
          _
        %p235 = scmp.lt.s32.totalorder %s21, 7
        %s236 = scalar_select %p235, %s21, 7
        %s237 = smul.addr %s236, 8
        %s238 = scalar_lea.vmem %s0, %s237
        %p239 = pneg %p42
        %p240 = pneg %p39
        %p241 = pneg %p63
        %p242 = pneg %p60
        %p243 = pneg %p84
        %p244 = pneg %p81
        %p245 = pneg %p105
        %p246 = pneg %p102
        %p247 = pneg %p126
        %p248 = pneg %p123
        %p249 = pneg %p147
        %p250 = pneg %p144
        %p251 = pneg %p173
        %p252 = pneg %p170
        %s253 = sand.u32 %s160, 1
        %s254 = scalar_lea.sflag [#allocation4], %s253
        %s255 = sand.u32 %s160, 1
        %s256 = smul.addr %s255, 8
        %s257 = scalar_lea.vmem [#allocation5], %s256
        %p258 = scmp.lt.s32.totalorder %s21, 7
        %s259 = scalar_select %p258, %s21, 7
        %s260 = smul.addr %s259, 8
        %s261 = scalar_lea.vmem %s0, %s260
        %v262 = vld [vmem:[%s261] sm:$0xff]
        %v263 = vld [vmem:[%s2] sm:$0xff]
        %v264 = vld [vmem:[%s2 + $0x8] sm:$0xff]
        %v265 = vld [vmem:[%s2 + $0x10] sm:$0xff]
        %v266 = vld [vmem:[%s2 + $0x18] sm:$0xff]
        %v267 = vld [vmem:[%s4] sm:$0x1]
        %v269 = vlaneseq
        %v270 = vshrl.u32 %v269, 7
        %v271 = vsub.s32 0, %v270
        %v272 = vrot.slane %v267, %v271
        %vm274 = vcmask 261120
        %v276 = vsel %vm274, %v262, 0
        %278 = vmatprep.subr.mxu0 0.0
        %279 = vmatpush1.msra.mxu0 %v263
        %280 = vmatprep.subr.mxu0 0.0
        %281 = vmatpush1.msra.mxu0 %v264
        %282 = vmatprep.subr.mxu0 0.0
        %283 = vmatpush1.msra.mxu0 %v265
        %284 = vmatprep.subr.mxu0 0.0
        %285 = vmatpush1.msra.mxu0 %v266
        %286 = vmatprep.subr.mxu0 0.0
        %287 = vmatpush1.msra.mxu0 0.0
        %288 = vmatprep.subr.mxu0 0.0
        %289 = vmatpush1.msra.mxu0 0.0
        %290 = vmatprep.subr.mxu0 0.0
        %291 = vmatpush1.msra.mxu0 0.0
        %292 = vmatprep.subr.mxu0 0.0
        %293 = vmatpush1.msra.mxu0 0.0
        %294 = vmatprep.subr.mxu0 0.0
        %295 = vmatpush1.msra.mxu0 0.0
        %296 = vmatprep.subr.mxu0 0.0
        %297 = vmatpush1.msra.mxu0 0.0
        %298 = vmatprep.subr.mxu0 0.0
        %299 = vmatpush1.msra.mxu0 0.0
        %300 = vmatprep.subr.mxu0 0.0
        %301 = vmatpush1.msra.mxu0 0.0
        %302 = vmatprep.subr.mxu0 0.0
        %303 = vmatpush1.msra.mxu0 0.0
        %304 = vmatprep.subr.mxu0 0.0
        %305 = vmatpush1.msra.mxu0 0.0
        %306 = vmatprep.subr.mxu0 0.0
        %307 = vmatpush1.msra.mxu0 0.0
        %308 = vmatprep.subr.mxu0 0.0
        %309 = vmatpush1.msra.mxu0 0.0
        %310 = vmatprep.subr.mxu0 0.0
        %311 = vmatpush1.msra.mxu0 0.0
        %312 = vmatprep.subr.mxu0 0.0
        %313 = vmatpush1.msra.mxu0 0.0
        %314 = vmatprep.subr.mxu0 0.0
        %315 = vmatpush1.msra.mxu0 0.0
        %316 = vmatprep.subr.mxu0 0.0
        %317 = vmatpush1.msra.mxu0 0.0
        %318 = vmatprep.subr.mxu0 0.0
        %319 = vmatpush1.msra.mxu0 0.0
        %320 = vmatprep.subr.mxu0 0.0
        %321 = vmatpush1.msra.mxu0 0.0
        %322 = vmatprep.subr.mxu0 0.0
        %323 = vmatpush1.msra.mxu0 0.0
        %324 = vmatprep.subr.mxu0 0.0
        %325 = vmatpush1.msra.mxu0 0.0
        %326 = vmatprep.subr.mxu0 0.0
        %327 = vmatpush1.msra.mxu0 0.0
        %328 = vmatprep.subr.mxu0 0.0
        %329 = vmatpush1.msra.mxu0 0.0
        %330 = vmatprep.subr.mxu0 0.0
        %331 = vmatpush1.msra.mxu0 0.0
        %332 = vmatprep.subr.mxu0 0.0
        %333 = vmatpush1.msra.mxu0 0.0
        %334 = vmatprep.subr.mxu0 0.0
        %335 = vmatpush1.msra.mxu0 0.0
        %336 = vmatprep.subr.mxu0 0.0
        %337 = vmatpush1.msra.mxu0 0.0
        %338 = vmatprep.subr.mxu0 0.0
        %339 = vmatpush1.msra.mxu0 0.0
        %340 = vmatprep.subr.mxu0 0.0
        %341 = vmatpush1.msra.mxu0 0.0
        %342 = vmatprep.mubr.f32.mxu0 0.0
        %343 = vmatmul.mubr.f32.gmra.mrb[0].mxu0 %v276
        %v344 = vpop.f32.mrb[0].mxu0
        %v345 = vadd.f32 %v272, %v344
        %v346 = vpop.f32.mrb[0].mxu0
        %347 = vdwg.mxu0
        %v348 = vmax.f32 %v345, 0.0
        %v349 = vld [vmem:[#allocation2] sm:$0xff]
        %v350 = vld [vmem:[#allocation2 + $0x8] sm:$0xff]
        %v351 = vld [vmem:[#allocation2 + $0x10] sm:$0xff]
        %v352 = vld [vmem:[#allocation2 + $0x18] sm:$0xff]
        %v353 = vld [vmem:[#allocation2 + $0x20] sm:$0xff]
        %v354 = vld [vmem:[#allocation2 + $0x28] sm:$0xff]
        %v355 = vld [vmem:[#allocation2 + $0x30] sm:$0xff]
        %v356 = vld [vmem:[#allocation2 + $0x38] sm:$0xff]
        %v357 = vld [vmem:[#allocation2 + $0x40] sm:$0xff]
        %v358 = vld [vmem:[#allocation2 + $0x48] sm:$0xff]
        %v359 = vld [vmem:[#allocation2 + $0x50] sm:$0xff]
        %v360 = vld [vmem:[#allocation2 + $0x58] sm:$0xff]
        %v361 = vld [vmem:[#allocation2 + $0x60] sm:$0xff]
        %v362 = vld [vmem:[#allocation2 + $0x68] sm:$0xff]
        %v363 = vld [vmem:[#allocation2 + $0x70] sm:$0xff]
        %v364 = vld [vmem:[#allocation2 + $0x78] sm:$0xff]
        %v365 = vld [vmem:[%s5] sm:$0x1]
        %v367 = vlaneseq
        %v368 = vshrl.u32 %v367, 7
        %v369 = vsub.s32 0, %v368
        %v370 = vrot.slane %v365, %v369
        %372 = vmatprep.subr.mxu0 0.0
        %373 = vmatpush1.msra.mxu0 %v349
        %374 = vmatprep.subr.mxu0 0.0
        %375 = vmatpush1.msra.mxu0 %v350
        %376 = vmatprep.subr.mxu0 0.0
        %377 = vmatpush1.msra.mxu0 %v351
        %378 = vmatprep.subr.mxu0 0.0
        %379 = vmatpush1.msra.mxu0 %v352
        %380 = vmatprep.subr.mxu0 0.0
        %381 = vmatpush1.msra.mxu0 %v353
        %382 = vmatprep.subr.mxu0 0.0
        %383 = vmatpush1.msra.mxu0 %v354
        %384 = vmatprep.subr.mxu0 0.0
        %385 = vmatpush1.msra.mxu0 %v355
        %386 = vmatprep.subr.mxu0 0.0
        %387 = vmatpush1.msra.mxu0 %v356
        %388 = vmatprep.subr.mxu0 0.0
        %389 = vmatpush1.msra.mxu0 %v357
        %390 = vmatprep.subr.mxu0 0.0
        %391 = vmatpush1.msra.mxu0 %v358
        %392 = vmatprep.subr.mxu0 0.0
        %393 = vmatpush1.msra.mxu0 %v359
        %394 = vmatprep.subr.mxu0 0.0
        %395 = vmatpush1.msra.mxu0 %v360
        %396 = vmatprep.subr.mxu0 0.0
        %397 = vmatpush1.msra.mxu0 %v361
        %398 = vmatprep.subr.mxu0 0.0
        %399 = vmatpush1.msra.mxu0 %v362
        %400 = vmatprep.subr.mxu0 0.0
        %401 = vmatpush1.msra.mxu0 %v363
        %402 = vmatprep.subr.mxu0 0.0
        %403 = vmatpush1.msra.mxu0 %v364
        %404 = vmatprep.subr.mxu0 0.0
        %405 = vmatpush1.msra.mxu0 0.0
        %406 = vmatprep.subr.mxu0 0.0
        %407 = vmatpush1.msra.mxu0 0.0
        %408 = vmatprep.subr.mxu0 0.0
        %409 = vmatpush1.msra.mxu0 0.0
        %410 = vmatprep.subr.mxu0 0.0
        %411 = vmatpush1.msra.mxu0 0.0
        %412 = vmatprep.subr.mxu0 0.0
        %413 = vmatpush1.msra.mxu0 0.0
        %414 = vmatprep.subr.mxu0 0.0
        %415 = vmatpush1.msra.mxu0 0.0
        %416 = vmatprep.subr.mxu0 0.0
        %417 = vmatpush1.msra.mxu0 0.0
        %418 = vmatprep.subr.mxu0 0.0
        %419 = vmatpush1.msra.mxu0 0.0
        %420 = vmatprep.subr.mxu0 0.0
        %421 = vmatpush1.msra.mxu0 0.0
        %422 = vmatprep.subr.mxu0 0.0
        %423 = vmatpush1.msra.mxu0 0.0
        %424 = vmatprep.subr.mxu0 0.0
        %425 = vmatpush1.msra.mxu0 0.0
        %426 = vmatprep.subr.mxu0 0.0
        %427 = vmatpush1.msra.mxu0 0.0
        %428 = vmatprep.subr.mxu0 0.0
        %429 = vmatpush1.msra.mxu0 0.0
        %430 = vmatprep.subr.mxu0 0.0
        %431 = vmatpush1.msra.mxu0 0.0
        %432 = vmatprep.subr.mxu0 0.0
        %433 = vmatpush1.msra.mxu0 0.0
        %434 = vmatprep.subr.mxu0 0.0
        %435 = vmatpush1.msra.mxu0 0.0
        %436 = vmatprep.mubr.f32.mxu0 0.0
        %437 = vmatmul.mubr.f32.gmra.mrb[0].mxu0 %v348
        %v438 = vpop.f32.mrb[0].mxu0
        %v439 = vadd.f32 %v370, %v438
        %v440 = vpop.f32.mrb[0].mxu0
        %441 = vdwg.mxu0
        %v442 = vmax.f32 %v439, 0.0
        %v443 = vld [vmem:[%s1] sm:$0x1]
        %v445 = vlaneseq
        %v446 = vshrl.u32 %v445, 7
        %v447 = vsub.s32 0, %v446
        %v448 = vrot.slane %v443, %v447
        %v450 = vadd.f32 %v442, %v448
        %451 = vmax.xlane.f32.xlu0 %v450
        %v452 = vpop.xlane.xlu0 %451
        %v453 = vsub.f32 %v450, %v452
        %v454 = vmul.f32 %v453, 1.442695
        %v455 = vpow.pop %v454
        %456 = vadd.xlane.f32.xlu0 %v455
        %v457 = vpop.xlane.xlu0 %456
        %v458 = vrcp.pop %v457
        %v459 = vmul.f32 %v457, %v458
        %v460 = vsub.f32 2.0, %v459
        %v461 = vmul.f32 %v458, %v460
        %v462 = vmul.f32 %v455, %v461
        %463 = vst [vmem:[%s257] sm:$0xff] %v462
        %s464 = sand.u32 %s160, 1
        %s465 = scalar_lea.sflag [#allocation4], %s464
        %s466 = sand.u32 %s160, 1
        %s467 = smul.addr %s466, 8
        %s468 = scalar_lea.vmem [#allocation5], %s467
        // Predicated region
        $region49: #{tpu_custom_call.1} parent=43 // pred_check
          %p469 = pneg %p170
        $region50: #{tpu_custom_call.1} parent=43 // pred_check_branch
          %471 = sbr.rel (%p469) target = $region52
        $region51: #{tpu_custom_call.1} parent=43 // pred_region
          %s473 = ssub.s32 128, 128
          %474 = vsyncadd %s465, %s473
          %s475 = smul.addr %s21, 128
          %s476 = scalar_lea.hbm %s6, %s475
          %s478 = sshll.u32 %s468, 4
          %s479 = int_to_ptr.vmem [resolvable:$true] %s478
          %481 = dma.vmem_to_hbm [thread:$0]  %s479, 128, %s476, %s465
        $region52: #{tpu_custom_call.1} parent=43 // pred_fallthru
          _
      $region44: #{tpu_custom_call.1} parent=5 // pred_fallthru
        _
      %p482 = scmp.le.s32.totalorder 2, %s16
      // Predicated region
      $region53: #{tpu_custom_call.1} parent=5 // pred_check
        %p483 = pneg %p482
      $region54: #{tpu_custom_call.1} parent=5 // pred_check_branch
        %485 = sbr.rel (%p483) target = $region56
      $region55: #{tpu_custom_call.1} parent=5 // pred_region
        %s486 = ssub.s32 %s16, 2
        // Predicated region
        $region57: #{tpu_custom_call.1} parent=55 // pred_check
          %p487 = pneg %p176
        $region58: #{tpu_custom_call.1} parent=55 // pred_check_branch
          %489 = sbr.rel (%p487) target = $region60
        $region59: #{tpu_custom_call.1} parent=55 // pred_region
          %s490 = sand.u32 %s161, 1
          %s491 = scalar_lea.sflag [#allocation4], %s490
          %s492 = sand.u32 %s161, 1
          %s493 = smul.addr %s492, 8
          %s494 = scalar_lea.vmem [#allocation5], %s493
          %495 = dma.done %s491, 128
        $region60: #{tpu_custom_call.1} parent=55 // pred_fallthru
          _
      $region56: #{tpu_custom_call.1} parent=5 // pred_fallthru
        _
    $region6: #{tpu_custom_call.1} parent=1 // loop_footer
      %s20 = sadd.s32 1, %s16
    $region7: #{tpu_custom_call.1} parent=1 // loop_footer_branch
      %15 = sbr.rel target = $region3
    $region8: #{tpu_custom_call.1} parent=1 // loop_exit
      _
    %496 = vsyncpa [#allocation3], 1
    %s497 = scalar_lea.sflag [#allocation3], 1
    %498 = vsyncpa %s497, 1
    %499 = vsyncpa [#allocation4], 1
    %s500 = scalar_lea.sflag [#allocation4], 1
    %501 = vsyncpa %s500, 1

// kernel: tpu_custom_call.1
$region0: #{tpu_custom_call.1}
  #allocation0 [shape = 'u32[]', space=smem, size = 0x4, offset = 0x4, fixed_abs, tag = 'smem constant byte address 0x4 - core index']
  #allocation1 [shape = 'u32[144,128]{1,0:T(1,128)}', space=vmem, size = 0x12000, scoped, tag = 'internal scratch']
  %s0 = inlined_call_operand.vmem [shape: f32[64,32], index: 0, kind: input, shape index: {}]
  %s1 = inlined_call_operand.vmem [shape: f32[1,128], index: 1, kind: input, shape index: {}]
  %s2 = inlined_call_operand.vmem [shape: f32[32,128], index: 2, kind: input, shape index: {}]
  %s3 = inlined_call_operand.hbm [shape: f32[128,128], index: 3, kind: input, shape index: {}]
  %s4 = inlined_call_operand.vmem [shape: f32[1,128], index: 4, kind: input, shape index: {}]
  %s5 = inlined_call_operand.vmem [shape: f32[1,128], index: 5, kind: input, shape index: {}]
  %s6 = inlined_call_operand.hbm [shape: f32[64,128], index: 6, kind: output, shape index: {}]
  %s7 = sld [smem:[#allocation0]]
  $region61: #{tpu_custom_call.1} parent=0
    _
  %s9 = ssub.s32 1, %s7
  %s10 = scalar_select 0, %s9, %s7
  $region1: #{tpu_custom_call.1} parent=0
    #allocation2 [shape = 'u8[65536]{0}', space=vmem, size = 0x10000, scoped, tag = 'input window, operand 3, single buffered']
    #allocation3 [shape = 's32[2]{0}', space=sflag, size = 0x8, scoped, tag = 'scoped memory for tpu_custom_call.1']
    #allocation4 [shape = 's32[2]{0}', space=sflag, size = 0x8, scoped, tag = 'scoped memory for tpu_custom_call.1']
    #allocation5 [shape = 'u8[8192]{0}', space=vmem, size = 0x2000, scoped, tag = 'output window, operand 0']
    %11 = vsyncpa [#allocation3], 0
    %12 = vsyncpa [#allocation4], 0
    %s13 = scalar_lea.sflag [#allocation4], 1
    %14 = vsyncpa %s13, 0
    loop: start=0, step=1, limit=10
    $region2: #{tpu_custom_call.1} parent=1 // loop_pre_header
      _
    $region3: #{tpu_custom_call.1} parent=1 // loop_header
      %s16 = sphi 0, %s20
      %p17 = scmp.ge.s32.totalorder %s16, 10
      %s26 = sphi 0, %s28
      %s29 = sphi 0, %s26
      %s30 = sphi 0, %s29
      %s46 = sphi 0, %s30
      %s50 = sphi 0, %s50
      %s52 = sphi 0, %s50
      %s53 = sphi 0, %s52
      %s67 = sphi 0, %s53
      %s71 = sphi 0, %s71
      %s73 = sphi 0, %s71
      %s74 = sphi 0, %s73
      %s88 = sphi 0, %s74
      %s92 = sphi 0, %s92
      %s94 = sphi 0, %s92
      %s95 = sphi 0, %s94
      %s109 = sphi 0, %s95
      %s113 = sphi 0, %s113
      %s115 = sphi 0, %s113
      %s116 = sphi 0, %s115
      %s130 = sphi 0, %s116
      %s134 = sphi 0, %s134
      %s136 = sphi 0, %s134
      %s137 = sphi 0, %s136
      %s151 = sphi 0, %s137
      %s157 = sphi 0, %s159
      %s160 = sphi 0, %s157
      %s161 = sphi 0, %s160
      %s177 = sphi 0, %s161
    $region4: #{tpu_custom_call.1} parent=1 // loop_header_branch
      %19 = sbr.rel (%p17) target = $region8
    $region5: #{tpu_custom_call.1} parent=1 // loop_body
      %s21 = ssub.s32 %s16, 1
      %s22 = ssub.s32 %s16, 2
      %s23 = sadd.s32 %s16, 1
      %s24 = ssub.s32 %s16, %s23
      %p25 = scmp.eq.s32.totalorder %s24, 0
      %s27 = sadd.s32 %s26, 1
      %s28 = scalar_select %p25, %s26, %s27
      %p31 = pneg %p25
      %p32 = scmp.eq.s32.totalorder %s16, 7
      %p33 = por %p31, %p32
      %p34 = scmp.ne.s32.totalorder %s26, %s29
      %p35 = scmp.eq.s32.totalorder %s16, 0
      %p36 = por %p34, %p35
      %p37 = scmp.ne.s32.totalorder %s26, %s29
      %p38 = scmp.eq.s32.totalorder %s21, 7
      %p39 = por %p37, %p38
      %p40 = scmp.ne.s32.totalorder %s29, %s30
      %p41 = scmp.eq.s32.totalorder %s21, 0
      %p42 = por %p40, %p41
      %p43 = scmp.ne.s32.totalorder %s29, %s30
      %p44 = scmp.eq.s32.totalorder %s22, 7
      %p45 = por %p43, %p44
      %p47 = scmp.ne.s32.totalorder %s30, %s46
      %p48 = scmp.eq.s32.totalorder %s22, 0
      %p49 = por %p47, %p48
      %s51 = sadd.s32 %s50, 1
      %p54 = scmp.eq.s32.totalorder %s16, 7
      %p55 = scmp.ne.s32.totalorder %s50, %s52
      %p56 = scmp.eq.s32.totalorder %s16, 0
      %p57 = por %p55, %p56
      %p58 = scmp.ne.s32.totalorder %s50, %s52
      %p59 = scmp.eq.s32.totalorder %s21, 7
      %p60 = por %p58, %p59
      %p61 = scmp.ne.s32.totalorder %s52, %s53
      %p62 = scmp.eq.s32.totalorder %s21, 0
      %p63 = por %p61, %p62
      %p64 = scmp.ne.s32.totalorder %s52, %s53
      %p65 = scmp.eq.s32.totalorder %s22, 7
      %p66 = por %p64, %p65
      %p68 = scmp.ne.s32.totalorder %s53, %s67
      %p69 = scmp.eq.s32.totalorder %s22, 0
      %p70 = por %p68, %p69
      %s72 = sadd.s32 %s71, 1
      %p75 = scmp.eq.s32.totalorder %s16, 7
      %p76 = scmp.ne.s32.totalorder %s71, %s73
      %p77 = scmp.eq.s32.totalorder %s16, 0
      %p78 = por %p76, %p77
      %p79 = scmp.ne.s32.totalorder %s71, %s73
      %p80 = scmp.eq.s32.totalorder %s21, 7
      %p81 = por %p79, %p80
      %p82 = scmp.ne.s32.totalorder %s73, %s74
      %p83 = scmp.eq.s32.totalorder %s21, 0
      %p84 = por %p82, %p83
      %p85 = scmp.ne.s32.totalorder %s73, %s74
      %p86 = scmp.eq.s32.totalorder %s22, 7
      %p87 = por %p85, %p86
      %p89 = scmp.ne.s32.totalorder %s74, %s88
      %p90 = scmp.eq.s32.totalorder %s22, 0
      %p91 = por %p89, %p90
      %s93 = sadd.s32 %s92, 1
      %p96 = scmp.eq.s32.totalorder %s16, 7
      %p97 = scmp.ne.s32.totalorder %s92, %s94
      %p98 = scmp.eq.s32.totalorder %s16, 0
      %p99 = por %p97, %p98
      %p100 = scmp.ne.s32.totalorder %s92, %s94
      %p101 = scmp.eq.s32.totalorder %s21, 7
      %p102 = por %p100, %p101
      %p103 = scmp.ne.s32.totalorder %s94, %s95
      %p104 = scmp.eq.s32.totalorder %s21, 0
      %p105 = por %p103, %p104
      %p106 = scmp.ne.s32.totalorder %s94, %s95
      %p107 = scmp.eq.s32.totalorder %s22, 7
      %p108 = por %p106, %p107
      %p110 = scmp.ne.s32.totalorder %s95, %s109
      %p111 = scmp.eq.s32.totalorder %s22, 0
      %p112 = por %p110, %p111
      %s114 = sadd.s32 %s113, 1
      %p117 = scmp.eq.s32.totalorder %s16, 7
      %p118 = scmp.ne.s32.totalorder %s113, %s115
      %p119 = scmp.eq.s32.totalorder %s16, 0
      %p120 = por %p118, %p119
      %p121 = scmp.ne.s32.totalorder %s113, %s115
      %p122 = scmp.eq.s32.totalorder %s21, 7
      %p123 = por %p121, %p122
      %p124 = scmp.ne.s32.totalorder %s115, %s116
      %p125 = scmp.eq.s32.totalorder %s21, 0
      %p126 = por %p124, %p125
      %p127 = scmp.ne.s32.totalorder %s115, %s116
      %p128 = scmp.eq.s32.totalorder %s22, 7
      %p129 = por %p127, %p128
      %p131 = scmp.ne.s32.totalorder %s116, %s130
      %p132 = scmp.eq.s32.totalorder %s22, 0
      %p133 = por %p131, %p132
      %s135 = sadd.s32 %s134, 1
      %p138 = scmp.eq.s32.totalorder %s16, 7
      %p139 = scmp.ne.s32.totalorder %s134, %s136
      %p140 = scmp.eq.s32.totalorder %s16, 0
      %p141 = por %p139, %p140
      %p142 = scmp.ne.s32.totalorder %s134, %s136
      %p143 = scmp.eq.s32.totalorder %s21, 7
      %p144 = por %p142, %p143
      %p145 = scmp.ne.s32.totalorder %s136, %s137
      %p146 = scmp.eq.s32.totalorder %s21, 0
      %p147 = por %p145, %p146
      %p148 = scmp.ne.s32.totalorder %s136, %s137
      %p149 = scmp.eq.s32.totalorder %s22, 7
      %p150 = por %p148, %p149
      %p152 = scmp.ne.s32.totalorder %s137, %s151
      %p153 = scmp.eq.s32.totalorder %s22, 0
      %p154 = por %p152, %p153
      %s155 = ssub.s32 %s16, %s23
      %p156 = scmp.eq.s32.totalorder %s155, 0
      %s158 = sadd.s32 %s157, 1
      %s159 = scalar_select %p156, %s157, %s158
      %p162 = pneg %p156
      %p163 = scmp.eq.s32.totalorder %s16, 7
      %p164 = por %p162, %p163
      %p165 = scmp.ne.s32.totalorder %s157, %s160
      %p166 = scmp.eq.s32.totalorder %s16, 0
      %p167 = por %p165, %p166
      %p168 = scmp.ne.s32.totalorder %s157, %s160
      %p169 = scmp.eq.s32.totalorder %s21, 7
      %p170 = por %p168, %p169
      %p171 = scmp.ne.s32.totalorder %s160, %s161
      %p172 = scmp.eq.s32.totalorder %s21, 0
      %p173 = por %p171, %p172
      %p174 = scmp.ne.s32.totalorder %s160, %s161
      %p175 = scmp.eq.s32.totalorder %s22, 7
      %p176 = por %p174, %p175
      %p178 = scmp.ne.s32.totalorder %s161, %s177
      %p179 = scmp.eq.s32.totalorder %s22, 0
      %p180 = por %p178, %p179
      %p181 = scmp.le.s32.totalorder 1, %s16
      %p182 = scmp.lt.s32.totalorder %s16, 9
      %p183 = pnand %p181, %p182
      %p184 = pneg %p183
      // Predicated region
      $region9: #{tpu_custom_call.1} parent=5 // pred_check
        _
      $region10: #{tpu_custom_call.1} parent=5 // pred_check_branch
        %186 = sbr.rel (%p183) target = $region12
      $region11: #{tpu_custom_call.1} parent=5 // pred_region
        %s187 = ssub.s32 %s16, 1
        // Predicated region
        $region13: #{tpu_custom_call.1} parent=11 // pred_check
          %p188 = pneg %p63
        $region14: #{tpu_custom_call.1} parent=11 // pred_check_branch
          %190 = sbr.rel (%p188) target = $region16
        $region15: #{tpu_custom_call.1} parent=11 // pred_region
          _
        $region16: #{tpu_custom_call.1} parent=11 // pred_fallthru
          _
        // Predicated region
        $region17: #{tpu_custom_call.1} parent=11 // pred_check
          %p191 = pneg %p84
        $region18: #{tpu_custom_call.1} parent=11 // pred_check_branch
          %193 = sbr.rel (%p191) target = $region20
        $region19: #{tpu_custom_call.1} parent=11 // pred_region
          _
        $region20: #{tpu_custom_call.1} parent=11 // pred_fallthru
          _
        // Predicated region
        $region21: #{tpu_custom_call.1} parent=11 // pred_check
          %p194 = pneg %p105
        $region22: #{tpu_custom_call.1} parent=11 // pred_check_branch
          %196 = sbr.rel (%p194) target = $region24
        $region23: #{tpu_custom_call.1} parent=11 // pred_region
          %s198 = ssub.s32 2048, 2048
          %199 = vsyncadd [#allocation3], %s198
          %s200 = sshll.u32 [#allocation2], 4
          %s201 = int_to_ptr.vmem [resolvable:$true] %s200
          %206 = dma.hbm_to_vmem [thread:$0]  %s3, 2048, %s201, [#allocation3], 128, 128, 8
        $region24: #{tpu_custom_call.1} parent=11 // pred_fallthru
          _
        // Predicated region
        $region25: #{tpu_custom_call.1} parent=11 // pred_check
          %p207 = pneg %p126
        $region26: #{tpu_custom_call.1} parent=11 // pred_check_branch
          %209 = sbr.rel (%p207) target = $region28
        $region27: #{tpu_custom_call.1} parent=11 // pred_region
          _
        $region28: #{tpu_custom_call.1} parent=11 // pred_fallthru
          _
        // Predicated region
        $region29: #{tpu_custom_call.1} parent=11 // pred_check
          %p210 = pneg %p147
        $region30: #{tpu_custom_call.1} parent=11 // pred_check_branch
          %212 = sbr.rel (%p210) target = $region32
        $region31: #{tpu_custom_call.1} parent=11 // pred_region
          _
        $region32: #{tpu_custom_call.1} parent=11 // pred_fallthru
          _
      $region12: #{tpu_custom_call.1} parent=5 // pred_fallthru
        _
      %p213 = scmp.lt.s32.totalorder %s16, 8
      // Predicated region
      $region33: #{tpu_custom_call.1} parent=5 // pred_check
        %p214 = pneg %p213
      $region34: #{tpu_custom_call.1} parent=5 // pred_check_branch
        %216 = sbr.rel (%p214) target = $region36
      $region35: #{tpu_custom_call.1} parent=5 // pred_region
        // Predicated region
        $region37: #{tpu_custom_call.1} parent=35 // pred_check
          %p217 = pneg %p36
        $region38: #{tpu_custom_call.1} parent=35 // pred_check_branch
          %219 = sbr.rel (%p217) target = $region40
        $region39: #{tpu_custom_call.1} parent=35 // pred_region
          %p220 = scmp.lt.s32.totalorder %s16, 7
          %s221 = scalar_select %p220, %s16, 7
          %s222 = smul.addr %s221, 8
          %s223 = scalar_lea.vmem %s0, %s222
        $region40: #{tpu_custom_call.1} parent=35 // pred_fallthru
          _
      $region36: #{tpu_custom_call.1} parent=5 // pred_fallthru
        _
      %p224 = scmp.le.s32.totalorder 1, %s16
      %p225 = scmp.lt.s32.totalorder %s16, 9
      %p226 = pnand %p224, %p225
      %p227 = pneg %p226
      // Predicated region
      $region41: #{tpu_custom_call.1} parent=5 // pred_check
        _
      $region42: #{tpu_custom_call.1} parent=5 // pred_check_branch
        %229 = sbr.rel (%p226) target = $region44
      $region43: #{tpu_custom_call.1} parent=5 // pred_region
        %s230 = ssub.s32 %s16, 1
        // Predicated region
        $region45: #{tpu_custom_call.1} parent=43 // pred_check
          %p231 = pneg %p105
        $region46: #{tpu_custom_call.1} parent=43 // pred_check_branch
          %233 = sbr.rel (%p231) target = $region48
        $region47: #{tpu_custom_call.1} parent=43 // pred_region
          %234 = dma.done [#allocation3], 2048
        $region48: #{tpu_custom_call.1} parent=43 // pred_fallthru
          _
        %p235 = scmp.lt.s32.totalorder %s21, 7
        %s236 = scalar_select %p235, %s21, 7
        %s237 = smul.addr %s236, 8
        %s238 = scalar_lea.vmem %s0, %s237
        %p239 = pneg %p42
        %p240 = pneg %p39
        %p241 = pneg %p63
        %p242 = pneg %p60
        %p243 = pneg %p84
        %p244 = pneg %p81
        %p245 = pneg %p105
        %p246 = pneg %p102
        %p247 = pneg %p126
        %p248 = pneg %p123
        %p249 = pneg %p147
        %p250 = pneg %p144
        %p251 = pneg %p173
        %p252 = pneg %p170
        %s253 = sand.u32 %s160, 1
        %s254 = scalar_lea.sflag [#allocation4], %s253
        %s255 = sand.u32 %s160, 1
        %s256 = smul.addr %s255, 8
        %s257 = scalar_lea.vmem [#allocation5], %s256
        %p258 = scmp.lt.s32.totalorder %s21, 7
        %s259 = scalar_select %p258, %s21, 7
        %s260 = smul.addr %s259, 8
        %s261 = scalar_lea.vmem %s0, %s260
        %v262 = vld [vmem:[%s261] sm:$0xff]
        %v263 = vld [vmem:[%s2] sm:$0xff]
        %v264 = vld [vmem:[%s2 + $0x8] sm:$0xff]
        %v265 = vld [vmem:[%s2 + $0x10] sm:$0xff]
        %v266 = vld [vmem:[%s2 + $0x18] sm:$0xff]
        %v267 = vld [vmem:[%s4] sm:$0x1]
        %v269 = vlaneseq
        %v270 = vshrl.u32 %v269, 7
        %v271 = vsub.s32 0, %v270
        %v272 = vrot.slane %v267, %v271
        %vm274 = vcmask 261120
        %v276 = vsel %vm274, %v262, 0
        %278 = vmatprep.subr.mxu0 0.0
        %279 = vmatpush1.msra.mxu0 %v263
        %280 = vmatprep.subr.mxu0 0.0
        %281 = vmatpush1.msra.mxu0 %v264
        %282 = vmatprep.subr.mxu0 0.0
        %283 = vmatpush1.msra.mxu0 %v265
        %284 = vmatprep.subr.mxu0 0.0
        %285 = vmatpush1.msra.mxu0 %v266
        %286 = vmatprep.subr.mxu0 0.0
        %287 = vmatpush1.msra.mxu0 0.0
        %288 = vmatprep.subr.mxu0 0.0
        %289 = vmatpush1.msra.mxu0 0.0
        %290 = vmatprep.subr.mxu0 0.0
        %291 = vmatpush1.msra.mxu0 0.0
        %292 = vmatprep.subr.mxu0 0.0
        %293 = vmatpush1.msra.mxu0 0.0
        %294 = vmatprep.subr.mxu0 0.0
        %295 = vmatpush1.msra.mxu0 0.0
        %296 = vmatprep.subr.mxu0 0.0
        %297 = vmatpush1.msra.mxu0 0.0
        %298 = vmatprep.subr.mxu0 0.0
        %299 = vmatpush1.msra.mxu0 0.0
        %300 = vmatprep.subr.mxu0 0.0
        %301 = vmatpush1.msra.mxu0 0.0
        %302 = vmatprep.subr.mxu0 0.0
        %303 = vmatpush1.msra.mxu0 0.0
        %304 = vmatprep.subr.mxu0 0.0
        %305 = vmatpush1.msra.mxu0 0.0
        %306 = vmatprep.subr.mxu0 0.0
        %307 = vmatpush1.msra.mxu0 0.0
        %308 = vmatprep.subr.mxu0 0.0
        %309 = vmatpush1.msra.mxu0 0.0
        %310 = vmatprep.subr.mxu0 0.0
        %311 = vmatpush1.msra.mxu0 0.0
        %312 = vmatprep.subr.mxu0 0.0
        %313 = vmatpush1.msra.mxu0 0.0
        %314 = vmatprep.subr.mxu0 0.0
        %315 = vmatpush1.msra.mxu0 0.0
        %316 = vmatprep.subr.mxu0 0.0
        %317 = vmatpush1.msra.mxu0 0.0
        %318 = vmatprep.subr.mxu0 0.0
        %319 = vmatpush1.msra.mxu0 0.0
        %320 = vmatprep.subr.mxu0 0.0
        %321 = vmatpush1.msra.mxu0 0.0
        %322 = vmatprep.subr.mxu0 0.0
        %323 = vmatpush1.msra.mxu0 0.0
        %324 = vmatprep.subr.mxu0 0.0
        %325 = vmatpush1.msra.mxu0 0.0
        %326 = vmatprep.subr.mxu0 0.0
        %327 = vmatpush1.msra.mxu0 0.0
        %328 = vmatprep.subr.mxu0 0.0
        %329 = vmatpush1.msra.mxu0 0.0
        %330 = vmatprep.subr.mxu0 0.0
        %331 = vmatpush1.msra.mxu0 0.0
        %332 = vmatprep.subr.mxu0 0.0
        %333 = vmatpush1.msra.mxu0 0.0
        %334 = vmatprep.subr.mxu0 0.0
        %335 = vmatpush1.msra.mxu0 0.0
        %336 = vmatprep.subr.mxu0 0.0
        %337 = vmatpush1.msra.mxu0 0.0
        %338 = vmatprep.subr.mxu0 0.0
        %339 = vmatpush1.msra.mxu0 0.0
        %340 = vmatprep.subr.mxu0 0.0
        %341 = vmatpush1.msra.mxu0 0.0
        %342 = vmatprep.mubr.f32.mxu0 0.0
        %343 = vmatmul.mubr.f32.gmra.mrb[0].mxu0 %v276
        %v344 = vpop.f32.mrb[0].mxu0
        %v345 = vadd.f32 %v272, %v344
        %v346 = vpop.f32.mrb[0].mxu0
        %347 = vdwg.mxu0
        %v348 = vmax.f32 %v345, 0.0
        %v349 = vld [vmem:[#allocation2] sm:$0xff]
        %v350 = vld [vmem:[#allocation2 + $0x8] sm:$0xff]
        %v351 = vld [vmem:[#allocation2 + $0x10] sm:$0xff]
        %v352 = vld [vmem:[#allocation2 + $0x18] sm:$0xff]
        %v353 = vld [vmem:[#allocation2 + $0x20] sm:$0xff]
        %v354 = vld [vmem:[#allocation2 + $0x28] sm:$0xff]
        %v355 = vld [vmem:[#allocation2 + $0x30] sm:$0xff]
        %v356 = vld [vmem:[#allocation2 + $0x38] sm:$0xff]
        %v357 = vld [vmem:[#allocation2 + $0x40] sm:$0xff]
        %v358 = vld [vmem:[#allocation2 + $0x48] sm:$0xff]
        %v359 = vld [vmem:[#allocation2 + $0x50] sm:$0xff]
        %v360 = vld [vmem:[#allocation2 + $0x58] sm:$0xff]
        %v361 = vld [vmem:[#allocation2 + $0x60] sm:$0xff]
        %v362 = vld [vmem:[#allocation2 + $0x68] sm:$0xff]
        %v363 = vld [vmem:[#allocation2 + $0x70] sm:$0xff]
        %v364 = vld [vmem:[#allocation2 + $0x78] sm:$0xff]
        %v365 = vld [vmem:[%s5] sm:$0x1]
        %v367 = vlaneseq
        %v368 = vshrl.u32 %v367, 7
        %v369 = vsub.s32 0, %v368
        %v370 = vrot.slane %v365, %v369
        %372 = vmatprep.subr.mxu0 0.0
        %373 = vmatpush1.msra.mxu0 %v349
        %374 = vmatprep.subr.mxu0 0.0
        %375 = vmatpush1.msra.mxu0 %v350
        %376 = vmatprep.subr.mxu0 0.0
        %377 = vmatpush1.msra.mxu0 %v351
        %378 = vmatprep.subr.mxu0 0.0
        %379 = vmatpush1.msra.mxu0 %v352
        %380 = vmatprep.subr.mxu0 0.0
        %381 = vmatpush1.msra.mxu0 %v353
        %382 = vmatprep.subr.mxu0 0.0
        %383 = vmatpush1.msra.mxu0 %v354
        %384 = vmatprep.subr.mxu0 0.0
        %385 = vmatpush1.msra.mxu0 %v355
        %386 = vmatprep.subr.mxu0 0.0
        %387 = vmatpush1.msra.mxu0 %v356
        %388 = vmatprep.subr.mxu0 0.0
        %389 = vmatpush1.msra.mxu0 %v357
        %390 = vmatprep.subr.mxu0 0.0
        %391 = vmatpush1.msra.mxu0 %v358
        %392 = vmatprep.subr.mxu0 0.0
        %393 = vmatpush1.msra.mxu0 %v359
        %394 = vmatprep.subr.mxu0 0.0
        %395 = vmatpush1.msra.mxu0 %v360
        %396 = vmatprep.subr.mxu0 0.0
        %397 = vmatpush1.msra.mxu0 %v361
        %398 = vmatprep.subr.mxu0 0.0
        %399 = vmatpush1.msra.mxu0 %v362
        %400 = vmatprep.subr.mxu0 0.0
        %401 = vmatpush1.msra.mxu0 %v363
        %402 = vmatprep.subr.mxu0 0.0
        %403 = vmatpush1.msra.mxu0 %v364
        %404 = vmatprep.subr.mxu0 0.0
        %405 = vmatpush1.msra.mxu0 0.0
        %406 = vmatprep.subr.mxu0 0.0
        %407 = vmatpush1.msra.mxu0 0.0
        %408 = vmatprep.subr.mxu0 0.0
        %409 = vmatpush1.msra.mxu0 0.0
        %410 = vmatprep.subr.mxu0 0.0
        %411 = vmatpush1.msra.mxu0 0.0
        %412 = vmatprep.subr.mxu0 0.0
        %413 = vmatpush1.msra.mxu0 0.0
        %414 = vmatprep.subr.mxu0 0.0
        %415 = vmatpush1.msra.mxu0 0.0
        %416 = vmatprep.subr.mxu0 0.0
        %417 = vmatpush1.msra.mxu0 0.0
        %418 = vmatprep.subr.mxu0 0.0
        %419 = vmatpush1.msra.mxu0 0.0
        %420 = vmatprep.subr.mxu0 0.0
        %421 = vmatpush1.msra.mxu0 0.0
        %422 = vmatprep.subr.mxu0 0.0
        %423 = vmatpush1.msra.mxu0 0.0
        %424 = vmatprep.subr.mxu0 0.0
        %425 = vmatpush1.msra.mxu0 0.0
        %426 = vmatprep.subr.mxu0 0.0
        %427 = vmatpush1.msra.mxu0 0.0
        %428 = vmatprep.subr.mxu0 0.0
        %429 = vmatpush1.msra.mxu0 0.0
        %430 = vmatprep.subr.mxu0 0.0
        %431 = vmatpush1.msra.mxu0 0.0
        %432 = vmatprep.subr.mxu0 0.0
        %433 = vmatpush1.msra.mxu0 0.0
        %434 = vmatprep.subr.mxu0 0.0
        %435 = vmatpush1.msra.mxu0 0.0
        %436 = vmatprep.mubr.f32.mxu0 0.0
        %437 = vmatmul.mubr.f32.gmra.mrb[0].mxu0 %v348
        %v438 = vpop.f32.mrb[0].mxu0
        %v439 = vadd.f32 %v370, %v438
        %v440 = vpop.f32.mrb[0].mxu0
        %441 = vdwg.mxu0
        %v442 = vmax.f32 %v439, 0.0
        %v443 = vld [vmem:[%s1] sm:$0x1]
        %v445 = vlaneseq
        %v446 = vshrl.u32 %v445, 7
        %v447 = vsub.s32 0, %v446
        %v448 = vrot.slane %v443, %v447
        %v450 = vadd.f32 %v442, %v448
        %451 = vmax.xlane.f32.xlu0 %v450
        %v452 = vpop.xlane.xlu0 %451
        %v453 = vsub.f32 %v450, %v452
        %v454 = vmul.f32 %v453, 1.442695
        %v455 = vpow.pop %v454
        %456 = vadd.xlane.f32.xlu0 %v455
        %v457 = vpop.xlane.xlu0 %456
        %v458 = vrcp.pop %v457
        %v459 = vmul.f32 %v457, %v458
        %v460 = vsub.f32 2.0, %v459
        %v461 = vmul.f32 %v458, %v460
        %v462 = vmul.f32 %v455, %v461
        %463 = vst [vmem:[%s257] sm:$0xff] %v462
        %s464 = sand.u32 %s160, 1
        %s465 = scalar_lea.sflag [#allocation4], %s464
        %s466 = sand.u32 %s160, 1
        %s467 = smul.addr %s466, 8
        %s468 = scalar_lea.vmem [#allocation5], %s467
        // Predicated region
        $region49: #{tpu_custom_call.1} parent=43 // pred_check
          %p469 = pneg %p170
        $region50: #{tpu_custom_call.1} parent=43 // pred_check_branch
          %471 = sbr.rel (%p469) target = $region52
        $region51: #{tpu_custom_call.1} parent=43 // pred_region
          %s473 = ssub.s32 128, 128
          %474 = vsyncadd %s465, %s473
          %s475 = smul.addr %s21, 128
          %s476 = scalar_lea.hbm %s6, %s475
          %s478 = sshll.u32 %s468, 4
          %s479 = int_to_ptr.vmem [resolvable:$true] %s478
          %481 = dma.vmem_to_hbm [thread:$0]  %s479, 128, %s476, %s465
        $region52: #{tpu_custom_call.1} parent=43 // pred_fallthru
          _
      $region44: #{tpu_custom_call.1} parent=5 // pred_fallthru
        _
      %p482 = scmp.le.s32.totalorder 2, %s16
      // Predicated region
      $region53: #{tpu_custom_call.1} parent=5 // pred_check
        %p483 = pneg %p482
      $region54: #{tpu_custom_call.1} parent=5 // pred_check_branch
        %485 = sbr.rel (%p483) target = $region56
      $region55: #{tpu_custom_call.1} parent=5 // pred_region
        %s486 = ssub.s32 %s16, 2
        // Predicated region
        $region57: #{tpu_custom_call.1} parent=55 // pred_check
          %p487 = pneg %p176
        $region58: #{tpu_custom_call.1} parent=55 // pred_check_branch
          %489 = sbr.rel (%p487) target = $region60
        $region59: #{tpu_custom_call.1} parent=55 // pred_region
          %s490 = sand.u32 %s161, 1
          %s491 = scalar_lea.sflag [#allocation4], %s490
          %s492 = sand.u32 %s161, 1
          %s493 = smul.addr %s492, 8
          %s494 = scalar_lea.vmem [#allocation5], %s493
          %495 = dma.done %s491, 128
        $region60: #{tpu_custom_call.1} parent=55 // pred_fallthru
          _
      $region56: #{tpu_custom_call.1} parent=5 // pred_fallthru
        _
    $region6: #{tpu_custom_call.1} parent=1 // loop_footer
      %s20 = sadd.s32 1, %s16
    $region7: #{tpu_custom_call.1} parent=1 // loop_footer_branch
      %15 = sbr.rel target = $region3
    $region8: #{tpu_custom_call.1} parent=1 // loop_exit
      _
    %496 = vsyncpa [#allocation3], 1
    %s497 = scalar_lea.sflag [#allocation3], 1
    %498 = vsyncpa %s497, 1
    %499 = vsyncpa [#allocation4], 1
    %s500 = scalar_lea.sflag [#allocation4], 1
    %501 = vsyncpa %s500, 1

</llo_original>
